<compile_context>
chip_gen: v7x
topology: tpu7x:2x2x1
jax: 0.10.0
libtpu: 0.0.40
codegen_flags: <defaults>
</compile_context>

<pallas_src>
import jax
import jax.numpy as jnp
from jax.experimental import pallas as pl
from jax.experimental.pallas import tpu as pltpu

_LANE = 128
_SUBLANE = 8


def _ceil_div(a, b):
    return -(-a // b)


def _round_up(a, b):
    return _ceil_div(a, b) * b


def bmse_loss(pred, label, weight, *, target_block_bytes=2 << 20):
    """total = B * sum(weight * (pred - label[:, None]) ** 2), computed in Pallas."""
    B, C, H, W = pred.shape
    HW = H * W
    total_rows = _ceil_div(HW, _LANE)

    # --- choose spatial tile size (rows of 128 lanes) ----------------------
    # Keep one pred/weight block around ~2 MiB in the *input* dtype: with
    # double buffering that is ~9 MiB of VMEM for pred+weight+label, which fits
    # every chip's default scoped VMEM (v5e 16 MiB, v6e/v7x 32 MiB) and leaves
    # plenty of headroom on v7x's 64 MiB physical VMEM.
    itemsize = max(pred.dtype.itemsize, weight.dtype.itemsize)
    max_rows = max(_SUBLANE, target_block_bytes // (C * _LANE * itemsize))
    if total_rows <= max_rows:
        rows_tile = total_rows
        num_tiles = 1
    else:
        rows_tile = (max_rows // _SUBLANE) * _SUBLANE
        num_tiles = _ceil_div(total_rows, rows_tile)
    padded_rows = rows_tile * num_tiles
    padded_hw = padded_rows * _LANE

    # --- layout: (B, C, padded_rows, 128); weight stays in its native dtype ---
    pred_f = pred.reshape(B, C, HW)
    weight_f = weight.reshape(B, C, HW)          # cast to f32 inside the kernel
    label_f = label.reshape(B, 1, HW)
    if padded_hw != HW:
        pad = ((0, 0), (0, 0), (0, padded_hw - HW))
        pred_f = jnp.pad(pred_f, pad)
        weight_f = jnp.pad(weight_f, pad)        # zero weight => padding contributes 0
        label_f = jnp.pad(label_f, pad)
    pred2 = pred_f.reshape(B, C, padded_rows, _LANE)
    weight2 = weight_f.reshape(B, C, padded_rows, _LANE)
    label2 = label_f.reshape(B, 1, padded_rows, _LANE)

    acc_rows = _round_up(rows_tile, _SUBLANE)    # vreg-aligned accumulator rows

    def kernel(pred_ref, label_ref, weight_ref, out_ref, acc_ref):
        j = pl.program_id(1)

        @pl.when(j == 0)
        def _init():
            acc_ref[...] = jnp.zeros_like(acc_ref)

        p = pred_ref[...].astype(jnp.float32)    # (1, C, rows_tile, 128)
        t = label_ref[...].astype(jnp.float32)   # (1, 1, rows_tile, 128) broadcasts over C
        w = weight_ref[...].astype(jnp.float32)  # (1, C, rows_tile, 128) -- weight.float()
        d = p - t
        # Reduce only over the outer (batch=1, C) dims: pure VPU adds, no XLU.
        partial = jnp.sum(w * d * d, axis=(0, 1))           # (rows_tile, 128)
        if rows_tile == acc_rows:
            acc_ref[...] += partial                          # full, unmasked
        else:
            acc_ref[:rows_tile, :] += partial                # tiny-shape path only

        @pl.when(j == pl.num_programs(1) - 1)
        def _finalize():
            a = acc_ref[...]                                 # (acc_rows, 128)
            # Fold rows to a single (8, 128) slab: still VPU-only elementwise adds.
            slab = a.reshape(acc_rows // _SUBLANE, _SUBLANE, _LANE).sum(axis=0)
            out_ref[0] = slab                                # lane-dense, unmasked store

    out = pl.pallas_call(
        kernel,
        out_shape=jax.ShapeDtypeStruct((B, _SUBLANE, _LANE), jnp.float32),
        grid_spec=pltpu.PrefetchScalarGridSpec(
            num_scalar_prefetch=0,
            grid=(B, num_tiles),
            in_specs=[
                pl.BlockSpec((1, C, rows_tile, _LANE), lambda b, j: (b, 0, j, 0)),  # pred
                pl.BlockSpec((1, 1, rows_tile, _LANE), lambda b, j: (b, 0, j, 0)),  # label
                pl.BlockSpec((1, C, rows_tile, _LANE), lambda b, j: (b, 0, j, 0)),  # weight
            ],
            out_specs=pl.BlockSpec((1, _SUBLANE, _LANE), lambda b, j: (b, 0, 0)),
            scratch_shapes=[pltpu.VMEM((acc_rows, _LANE), jnp.float32)],
        ),
        compiler_params=pltpu.CompilerParams(
            # batch axis can shard across both TensorCores on v7x; the spatial
            # reduction axis carries the accumulator -> "arbitrary".
            dimension_semantics=("parallel", "arbitrary"),
        ),
    )(pred2, label2, weight2)

    # Per-batch (8,128) partials -> scalar; the reference adds the *full*
    # weighted sum once per batch element, hence the * B factor.
    return jnp.sum(out) * jnp.float32(B)


class BMSE:
    """Minimal JAX/Pallas port of the PyTorch BMSE module (forward only)."""

    def __init__(self, use_sigmoid=False, use_mask=False, reduction='mean',
                 class_weight=None, loss_weight=1.0):
        assert use_sigmoid is False or use_mask is False
        self.use_sigmoid = use_sigmoid
        self.use_mask = use_mask
        self.reduction = reduction
        self.loss_weight = loss_weight
        self.class_weight = class_weight  # does not affect the returned value in the reference

    def __call__(self, cls_score, label, weight=None, avg_factor=None,
                 reduction_override=None):
        assert reduction_override in (None, 'none', 'mean', 'sum')
        # `reduction` / `avg_factor` / `class_weight` / `loss_weight` do not
        # affect the returned value in the reference implementation.
        # TODO(synk): the reference's per-batch mask/class_weight computation is
        # dead code (never feeds the loss) and is intentionally omitted.
        assert weight is not None, "reference crashes with weight=None (None * tensor)"
        return bmse_loss(cls_score, label, weight)


if __name__ == "__main__":
    key = jax.random.PRNGKey(0)
    k1, k2, k3 = jax.random.split(key, 3)

    B, C, H, W = 2, 4, 16, 16
    pred = jax.random.normal(k1, (B, C, H, W), dtype=jnp.float32)
    label = jax.random.uniform(k2, (B, H, W), dtype=jnp.float32, minval=-0.5, maxval=1.0)
    weight = jax.random.uniform(k3, (B, C, H, W), dtype=jnp.float32)

    loss_mod = BMSE()
    out = loss_mod(pred, label, weight)
    out = jax.block_until_ready(out)

    # pure-JAX reference for sanity
    ref = B * jnp.sum(weight.astype(jnp.float32) * (pred - label[:, None, :, :]) ** 2)
    assert jnp.allclose(out, ref, rtol=1e-5, atol=1e-4), (out, ref)

    print("KERNEL_OK")
</pallas_src>

<mosaic_0001>
module attributes {stable_mosaic.version = 11 : i64} {
  func.func @kernel(%arg0: i32, %arg1: i32, %arg2: memref<1x4x2x128xf32, #tpu.memory_space<vmem>>, %arg3: memref<1x1x2x128xf32, #tpu.memory_space<vmem>>, %arg4: memref<1x4x2x128xf32, #tpu.memory_space<vmem>>, %arg5: memref<1x8x128xf32, #tpu.memory_space<vmem>>, %arg6: memref<8x128xf32, #tpu.memory_space<vmem>>) attributes {dimension_semantics = [#tpu.dimension_semantics<parallel>, #tpu.dimension_semantics<arbitrary>], iteration_bounds = array<i64: 2, 1>, scalar_prefetch = 0 : i64, scratch_operands = 1 : i64, tpu.core_type = #tpu.core_type<tc>, window_params = [{transform_indices = @transform_0, window_bounds = array<i64: 1, 4, 2, 128>}, {transform_indices = @transform_1, window_bounds = array<i64: 1, 1, 2, 128>}, {transform_indices = @transform_2, window_bounds = array<i64: 1, 4, 2, 128>}, {transform_indices = @transform_3, window_bounds = array<i64: 1, 8, 128>}]} {
    %c0_i32 = arith.constant 0 : i32
    %0 = arith.cmpi eq, %arg1, %c0_i32 : i32
    %1 = arith.extui %0 : i1 to i32
    %c0_i32_0 = arith.constant 0 : i32
    %2 = arith.cmpi ne, %1, %c0_i32_0 : i32
    scf.if %2 {
      %cst_18 = arith.constant 0.000000e+00 : f32
      %17 = vector.broadcast %cst_18 : f32 to vector<8x128xf32>
      %c0_19 = arith.constant 0 : index
      %c0_20 = arith.constant 0 : index
      %18 = vector.load %arg6[%c0_19, %c0_20] : memref<8x128xf32, #tpu.memory_space<vmem>>, vector<8x128xf32>
      tpu.vector_store %arg6[%c0_19, %c0_20], %17 {strides = array<i32>} : memref<8x128xf32, #tpu.memory_space<vmem>>, vector<8x128xf32>,
    } else {
    }
    %c0 = arith.constant 0 : index
    %c0_1 = arith.constant 0 : index
    %c0_2 = arith.constant 0 : index
    %c0_3 = arith.constant 0 : index
    %3 = vector.load %arg2[%c0, %c0_1, %c0_2, %c0_3] : memref<1x4x2x128xf32, #tpu.memory_space<vmem>>, vector<1x4x2x128xf32>
    %c0_4 = arith.constant 0 : index
    %c0_5 = arith.constant 0 : index
    %c0_6 = arith.constant 0 : index
    %c0_7 = arith.constant 0 : index
    %4 = vector.load %arg3[%c0_4, %c0_5, %c0_6, %c0_7] : memref<1x1x2x128xf32, #tpu.memory_space<vmem>>, vector<1x1x2x128xf32>
    %c0_8 = arith.constant 0 : index
    %c0_9 = arith.constant 0 : index
    %c0_10 = arith.constant 0 : index
    %c0_11 = arith.constant 0 : index
    %5 = vector.load %arg4[%c0_8, %c0_9, %c0_10, %c0_11] : memref<1x4x2x128xf32, #tpu.memory_space<vmem>>, vector<1x4x2x128xf32>
    %6 = vector.broadcast %4 : vector<1x1x2x128xf32> to vector<1x4x2x128xf32>
    %7 = arith.subf %3, %6 : vector<1x4x2x128xf32>
    %8 = arith.mulf %5, %7 : vector<1x4x2x128xf32>
    %9 = arith.mulf %8, %7 : vector<1x4x2x128xf32>
    %cst = arith.constant dense<0.000000e+00> : vector<2x128xf32>
    %10 = vector.multi_reduction <add>, %9, %cst [0, 1] : vector<1x4x2x128xf32> to vector<2x128xf32>
    %c0_12 = arith.constant 0 : index
    %c0_13 = arith.constant 0 : index
    %11 = vector.load %arg6[%c0_12, %c0_13] : memref<8x128xf32, #tpu.memory_space<vmem>>, vector<2x128xf32>
    %12 = arith.addf %11, %10 : vector<2x128xf32>
    %c0_14 = arith.constant 0 : index
    %c0_15 = arith.constant 0 : index
    %13 = vector.load %arg6[%c0_14, %c0_15] : memref<8x128xf32, #tpu.memory_space<vmem>>, vector<2x128xf32>
    tpu.vector_store %arg6[%c0_14, %c0_15], %12 {strides = array<i32>} : memref<8x128xf32, #tpu.memory_space<vmem>>, vector<2x128xf32>,
    %c0_i32_16 = arith.constant 0 : i32
    %14 = arith.cmpi eq, %arg1, %c0_i32_16 : i32
    %15 = arith.extui %14 : i1 to i32
    %c0_i32_17 = arith.constant 0 : i32
    %16 = arith.cmpi ne, %15, %c0_i32_17 : i32
    scf.if %16 {
      %c0_18 = arith.constant 0 : index
      %c0_19 = arith.constant 0 : index
      %17 = vector.load %arg6[%c0_18, %c0_19] : memref<8x128xf32, #tpu.memory_space<vmem>>, vector<8x128xf32>
      %18 = vector.shape_cast %17 : vector<8x128xf32> to vector<1x8x128xf32>
      %cst_20 = arith.constant dense<0.000000e+00> : vector<8x128xf32>
      %19 = vector.multi_reduction <add>, %18, %cst_20 [0] : vector<1x8x128xf32> to vector<8x128xf32>
      %c0_21 = arith.constant 0 : index
      %c0_22 = arith.constant 0 : index
      %c0_23 = arith.constant 0 : index
      %20 = vector.load %arg5[%c0_21, %c0_22, %c0_23] : memref<1x8x128xf32, #tpu.memory_space<vmem>>, vector<1x8x128xf32>
      %21 = vector.shape_cast %20 : vector<1x8x128xf32> to vector<8x128xf32>
      %22 = vector.shape_cast %19 : vector<8x128xf32> to vector<1x8x128xf32>
      tpu.vector_store %arg5[%c0_21, %c0_22, %c0_23], %22 {strides = array<i32>} : memref<1x8x128xf32, #tpu.memory_space<vmem>>, vector<1x8x128xf32>,
    } else {
    }
    return
  }
  func.func @transform_0(%arg0: i32, %arg1: i32) -> (i32, i32, i32, i32) {
    %c0_i32 = arith.constant 0 : i32
    %c0_i32_0 = arith.constant 0 : i32
    %c0_i32_1 = arith.constant 0 : i32
    return %arg0, %c0_i32, %arg1, %c0_i32_0 : i32, i32, i32, i32
  }
  func.func @transform_1(%arg0: i32, %arg1: i32) -> (i32, i32, i32, i32) {
    %c0_i32 = arith.constant 0 : i32
    %c0_i32_0 = arith.constant 0 : i32
    %c0_i32_1 = arith.constant 0 : i32
    return %arg0, %c0_i32, %arg1, %c0_i32_0 : i32, i32, i32, i32
  }
  func.func @transform_2(%arg0: i32, %arg1: i32) -> (i32, i32, i32, i32) {
    %c0_i32 = arith.constant 0 : i32
    %c0_i32_0 = arith.constant 0 : i32
    %c0_i32_1 = arith.constant 0 : i32
    return %arg0, %c0_i32, %arg1, %c0_i32_0 : i32, i32, i32, i32
  }
  func.func @transform_3(%arg0: i32, %arg1: i32) -> (i32, i32, i32) {
    %c0_i32 = arith.constant 0 : i32
    %c0_i32_0 = arith.constant 0 : i32
    %c0_i32_1 = arith.constant 0 : i32
    return %arg0, %c0_i32, %c0_i32_0 : i32, i32, i32
  }
}

</mosaic_0001>

<llo_original>
// kernel: tpu_custom_call.1
$region0: #{tpu_custom_call.1}
  #allocation0 [shape = 'u32[]', space=smem, size = 0x4, offset = 0x4, fixed_abs, tag = 'smem constant byte address 0x4 - core index']
  #allocation1 [shape = 'u32[144,128]{1,0:T(1,128)}', space=vmem, size = 0x12000, scoped, tag = 'internal scratch']
  #allocation2 [shape = 'f32[8,128]{1,0:T(8,128)}', space=vmem, size = 0x1000, scoped, tag = 'scratch operand']
  %s0 = inlined_call_operand.hbm [shape: f32[2,4,2,128], index: 0, kind: input, shape index: {}]
  %s1 = inlined_call_operand.hbm [shape: f32[2,1,2,128], index: 1, kind: input, shape index: {}]
  %s2 = inlined_call_operand.hbm [shape: f32[2,4,2,128], index: 2, kind: input, shape index: {}]
  %s3 = inlined_call_operand.hbm [shape: f32[2,8,128], index: 3, kind: output, shape index: {}]
  %s4 = sld [smem:[#allocation0]]
  $region65: #{tpu_custom_call.1} parent=0
    _
  %s6 = ssub.s32 1, %s4
  %s7 = scalar_select 0, %s6, %s4
  $region1: #{tpu_custom_call.1} parent=0
    #allocation3 [shape = 'u8[8192]{0}', space=vmem, size = 0x2000, scoped, tag = 'input window, operand 0']
    #allocation4 [shape = 's32[2]{0}', space=sflag, size = 0x8, scoped, tag = 'scoped memory for tpu_custom_call.1']
    #allocation5 [shape = 's32[2]{0}', space=sflag, size = 0x8, scoped, tag = 'scoped memory for tpu_custom_call.1']
    #allocation6 [shape = 'u8[2048]{0}', space=vmem, size = 0x800, scoped, tag = 'input window, operand 1']
    #allocation7 [shape = 's32[2]{0}', space=sflag, size = 0x8, scoped, tag = 'scoped memory for tpu_custom_call.1']
    #allocation8 [shape = 'u8[8192]{0}', space=vmem, size = 0x2000, scoped, tag = 'input window, operand 2']
    #allocation9 [shape = 'u8[8192]{0}', space=vmem, size = 0x2000, scoped, tag = 'output window, operand 0']
    %8 = vsyncpa [#allocation4], 0
    %s9 = scalar_lea.sflag [#allocation4], 1
    %10 = vsyncpa %s9, 0
    %11 = vsyncpa [#allocation7], 0
    %s12 = scalar_lea.sflag [#allocation7], 1
    %13 = vsyncpa %s12, 0
    %14 = vsyncpa [#allocation5], 0
    %s15 = scalar_lea.sflag [#allocation5], 1
    %16 = vsyncpa %s15, 0
    loop: start=0, step=1, limit=4
    $region2: #{tpu_custom_call.1} parent=1 // loop_pre_header
      _
    $region3: #{tpu_custom_call.1} parent=1 // loop_header
      %s18 = sphi 0, %s22
      %p19 = scmp.ge.s32.totalorder %s18, 4
      %s25 = sphi 0, %s37
      %s26 = sphi 0, %s33
      %s27 = sphi 0, %s25
      %s28 = sphi 0, %s26
      %s29 = sphi 0, %s27
      %s30 = sphi 0, %s28
      %s42 = sphi 0, %s44
      %s45 = sphi 0, %s42
      %s46 = sphi 0, %s45
      %s62 = sphi 0, %s46
      %s70 = sphi 0, %s72
      %s73 = sphi 0, %s70
      %s74 = sphi 0, %s73
      %s90 = sphi 0, %s74
      %s98 = sphi 0, %s100
      %s101 = sphi 0, %s98
      %s102 = sphi 0, %s101
      %s118 = sphi 0, %s102
      %s124 = sphi 0, %s126
      %s127 = sphi 0, %s124
      %s128 = sphi 0, %s127
      %s144 = sphi 0, %s128
    $region4: #{tpu_custom_call.1} parent=1 // loop_header_branch
      %21 = sbr.rel (%p19) target = $region8
    $region5: #{tpu_custom_call.1} parent=1 // loop_body
      %s23 = ssub.s32 %s18, 1
      %s24 = ssub.s32 %s18, 2
      %s31 = sadd.s32 1, %s26
      %p32 = scmp.ge.s32.totalorder %s31, 1
      %s33 = scalar_select %p32, 0, %s31
      %s34 = sadd.s32 1, %s25
      %s35 = scalar_select %p32, %s34, %s25
      %p36 = scmp.ge.s32.totalorder %s35, 2
      %s37 = scalar_select %p36, 0, %s35
      %s38 = ssub.s32 %s25, %s37
      %s39 = ssub.s32 %s26, %s33
      %s40 = sor.u32 %s38, %s39
      %p41 = scmp.eq.s32.totalorder %s40, 0
      %s43 = sadd.s32 %s42, 1
      %s44 = scalar_select %p41, %s42, %s43
      %p47 = pneg %p41
      %p48 = scmp.eq.s32.totalorder %s18, 1
      %p49 = por %p47, %p48
      %p50 = scmp.ne.s32.totalorder %s42, %s45
      %p51 = scmp.eq.s32.totalorder %s18, 0
      %p52 = por %p50, %p51
      %p53 = scmp.ne.s32.totalorder %s42, %s45
      %p54 = scmp.eq.s32.totalorder %s23, 1
      %p55 = por %p53, %p54
      %p56 = scmp.ne.s32.totalorder %s45, %s46
      %p57 = scmp.eq.s32.totalorder %s23, 0
      %p58 = por %p56, %p57
      %p59 = scmp.ne.s32.totalorder %s45, %s46
      %p60 = scmp.eq.s32.totalorder %s24, 1
      %p61 = por %p59, %p60
      %p63 = scmp.ne.s32.totalorder %s46, %s62
      %p64 = scmp.eq.s32.totalorder %s24, 0
      %p65 = por %p63, %p64
      %s66 = ssub.s32 %s25, %s37
      %s67 = ssub.s32 %s26, %s33
      %s68 = sor.u32 %s66, %s67
      %p69 = scmp.eq.s32.totalorder %s68, 0
      %s71 = sadd.s32 %s70, 1
      %s72 = scalar_select %p69, %s70, %s71
      %p75 = pneg %p69
      %p76 = scmp.eq.s32.totalorder %s18, 1
      %p77 = por %p75, %p76
      %p78 = scmp.ne.s32.totalorder %s70, %s73
      %p79 = scmp.eq.s32.totalorder %s18, 0
      %p80 = por %p78, %p79
      %p81 = scmp.ne.s32.totalorder %s70, %s73
      %p82 = scmp.eq.s32.totalorder %s23, 1
      %p83 = por %p81, %p82
      %p84 = scmp.ne.s32.totalorder %s73, %s74
      %p85 = scmp.eq.s32.totalorder %s23, 0
      %p86 = por %p84, %p85
      %p87 = scmp.ne.s32.totalorder %s73, %s74
      %p88 = scmp.eq.s32.totalorder %s24, 1
      %p89 = por %p87, %p88
      %p91 = scmp.ne.s32.totalorder %s74, %s90
      %p92 = scmp.eq.s32.totalorder %s24, 0
      %p93 = por %p91, %p92
      %s94 = ssub.s32 %s25, %s37
      %s95 = ssub.s32 %s26, %s33
      %s96 = sor.u32 %s94, %s95
      %p97 = scmp.eq.s32.totalorder %s96, 0
      %s99 = sadd.s32 %s98, 1
      %s100 = scalar_select %p97, %s98, %s99
      %p103 = pneg %p97
      %p104 = scmp.eq.s32.totalorder %s18, 1
      %p105 = por %p103, %p104
      %p106 = scmp.ne.s32.totalorder %s98, %s101
      %p107 = scmp.eq.s32.totalorder %s18, 0
      %p108 = por %p106, %p107
      %p109 = scmp.ne.s32.totalorder %s98, %s101
      %p110 = scmp.eq.s32.totalorder %s23, 1
      %p111 = por %p109, %p110
      %p112 = scmp.ne.s32.totalorder %s101, %s102
      %p113 = scmp.eq.s32.totalorder %s23, 0
      %p114 = por %p112, %p113
      %p115 = scmp.ne.s32.totalorder %s101, %s102
      %p116 = scmp.eq.s32.totalorder %s24, 1
      %p117 = por %p115, %p116
      %p119 = scmp.ne.s32.totalorder %s102, %s118
      %p120 = scmp.eq.s32.totalorder %s24, 0
      %p121 = por %p119, %p120
      %s122 = ssub.s32 %s25, %s37
      %p123 = scmp.eq.s32.totalorder %s122, 0
      %s125 = sadd.s32 %s124, 1
      %s126 = scalar_select %p123, %s124, %s125
      %p129 = pneg %p123
      %p130 = scmp.eq.s32.totalorder %s18, 1
      %p131 = por %p129, %p130
      %p132 = scmp.ne.s32.totalorder %s124, %s127
      %p133 = scmp.eq.s32.totalorder %s18, 0
      %p134 = por %p132, %p133
      %p135 = scmp.ne.s32.totalorder %s124, %s127
      %p136 = scmp.eq.s32.totalorder %s23, 1
      %p137 = por %p135, %p136
      %p138 = scmp.ne.s32.totalorder %s127, %s128
      %p139 = scmp.eq.s32.totalorder %s23, 0
      %p140 = por %p138, %p139
      %p141 = scmp.ne.s32.totalorder %s127, %s128
      %p142 = scmp.eq.s32.totalorder %s24, 1
      %p143 = por %p141, %p142
      %p145 = scmp.ne.s32.totalorder %s128, %s144
      %p146 = scmp.eq.s32.totalorder %s24, 0
      %p147 = por %p145, %p146
      %p148 = scmp.le.s32.totalorder 1, %s18
      %p149 = scmp.lt.s32.totalorder %s18, 3
      %p150 = pnand %p148, %p149
      %p151 = pneg %p150
      // Predicated region
      $region9: #{tpu_custom_call.1} parent=5 // pred_check
        _
      $region10: #{tpu_custom_call.1} parent=5 // pred_check_branch
        %153 = sbr.rel (%p150) target = $region12
      $region11: #{tpu_custom_call.1} parent=5 // pred_region
        %s154 = ssub.s32 %s18, 1
      $region12: #{tpu_custom_call.1} parent=5 // pred_fallthru
        _
      %p155 = scmp.lt.s32.totalorder %s18, 2
      // Predicated region
      $region13: #{tpu_custom_call.1} parent=5 // pred_check
        %p156 = pneg %p155
      $region14: #{tpu_custom_call.1} parent=5 // pred_check_branch
        %158 = sbr.rel (%p156) target = $region16
      $region15: #{tpu_custom_call.1} parent=5 // pred_region
        // Predicated region
        $region17: #{tpu_custom_call.1} parent=15 // pred_check
          %p159 = pneg %p52
        $region18: #{tpu_custom_call.1} parent=15 // pred_check_branch
          %161 = sbr.rel (%p159) target = $region20
        $region19: #{tpu_custom_call.1} parent=15 // pred_region
          %s162 = sand.u32 %s42, 1
          %s163 = scalar_lea.sflag [#allocation4], %s162
          %s164 = sand.u32 %s42, 1
          %s165 = smul.addr %s164, 8
          %s166 = scalar_lea.vmem [#allocation3], %s165
          %s168 = ssub.s32 128, 128
          %169 = vsyncadd %s163, %s168
          %s170 = smul.addr %s25, 4
          %s171 = sadd.s32 %s26, %s170
          %s172 = smul.addr %s171, 32
          %s173 = scalar_lea.hbm %s0, %s172
          %s174 = sshll.u32 %s166, 4
          %s175 = int_to_ptr.vmem [resolvable:$true] %s174
          %180 = dma.hbm_to_vmem [thread:$0]  %s173, 128, %s175, %s163, 32, 32, 2
        $region20: #{tpu_custom_call.1} parent=15 // pred_fallthru
          _
        // Predicated region
        $region21: #{tpu_custom_call.1} parent=15 // pred_check
          %p181 = pneg %p80
        $region22: #{tpu_custom_call.1} parent=15 // pred_check_branch
          %183 = sbr.rel (%p181) target = $region24
        $region23: #{tpu_custom_call.1} parent=15 // pred_region
          %s184 = sand.u32 %s18, 1
          %s185 = scalar_lea.sflag [#allocation7], %s184
          %s186 = sand.u32 %s70, 1
          %s187 = smul.addr %s186, 2
          %s188 = scalar_lea.vmem [#allocation6], %s187
          %s190 = ssub.s32 32, 32
          %191 = vsyncadd %s185, %s190
          %s192 = sadd.s32 %s26, %s25
          %s193 = smul.addr %s192, 32
          %s194 = scalar_lea.hbm %s1, %s193
          %s196 = sshll.u32 %s188, 4
          %s197 = int_to_ptr.vmem [resolvable:$true] %s196
          %199 = dma.hbm_to_vmem [thread:$0]  %s194, 32, %s197, %s185
        $region24: #{tpu_custom_call.1} parent=15 // pred_fallthru
          _
        // Predicated region
        $region25: #{tpu_custom_call.1} parent=15 // pred_check
          %p200 = pneg %p108
        $region26: #{tpu_custom_call.1} parent=15 // pred_check_branch
          %202 = sbr.rel (%p200) target = $region28
        $region27: #{tpu_custom_call.1} parent=15 // pred_region
          %s203 = sand.u32 %s18, 1
          %s204 = scalar_lea.sflag [#allocation7], %s203
          %s205 = sand.u32 %s98, 1
          %s206 = smul.addr %s205, 8
          %s207 = scalar_lea.vmem [#allocation8], %s206
          %s209 = ssub.s32 128, 128
          %210 = vsyncadd %s204, %s209
          %s211 = smul.addr %s25, 4
          %s212 = sadd.s32 %s26, %s211
          %s213 = smul.addr %s212, 32
          %s214 = scalar_lea.hbm %s2, %s213
          %s215 = sshll.u32 %s207, 4
          %s216 = int_to_ptr.vmem [resolvable:$true] %s215
          %221 = dma.hbm_to_vmem [thread:$0]  %s214, 128, %s216, %s204, 32, 32, 2
        $region28: #{tpu_custom_call.1} parent=15 // pred_fallthru
          _
      $region16: #{tpu_custom_call.1} parent=5 // pred_fallthru
        _
      %p222 = scmp.le.s32.totalorder 1, %s18
      %p223 = scmp.lt.s32.totalorder %s18, 3
      %p224 = pnand %p222, %p223
      %p225 = pneg %p224
      // Predicated region
      $region29: #{tpu_custom_call.1} parent=5 // pred_check
        _
      $region30: #{tpu_custom_call.1} parent=5 // pred_check_branch
        %227 = sbr.rel (%p224) target = $region32
      $region31: #{tpu_custom_call.1} parent=5 // pred_region
        %s228 = ssub.s32 %s18, 1
        %s229 = sand.u32 %s45, 1
        %s230 = scalar_lea.sflag [#allocation4], %s229
        %s231 = sand.u32 %s45, 1
        %s232 = smul.addr %s231, 8
        %s233 = scalar_lea.vmem [#allocation3], %s232
        // Predicated region
        $region33: #{tpu_custom_call.1} parent=31 // pred_check
          %p234 = pneg %p58
        $region34: #{tpu_custom_call.1} parent=31 // pred_check_branch
          %236 = sbr.rel (%p234) target = $region36
        $region35: #{tpu_custom_call.1} parent=31 // pred_region
          %237 = dma.done %s230, 128
        $region36: #{tpu_custom_call.1} parent=31 // pred_fallthru
          _
        %s238 = sand.u32 %s23, 1
        %s239 = scalar_lea.sflag [#allocation7], %s238
        %s240 = sand.u32 %s73, 1
        %s241 = smul.addr %s240, 2
        %s242 = scalar_lea.vmem [#allocation6], %s241
        // Predicated region
        $region37: #{tpu_custom_call.1} parent=31 // pred_check
          %p243 = pneg %p86
        $region38: #{tpu_custom_call.1} parent=31 // pred_check_branch
          %245 = sbr.rel (%p243) target = $region40
        $region39: #{tpu_custom_call.1} parent=31 // pred_region
          %246 = dma.done %s239, 32
        $region40: #{tpu_custom_call.1} parent=31 // pred_fallthru
          _
        %s247 = sand.u32 %s23, 1
        %s248 = scalar_lea.sflag [#allocation7], %s247
        %s249 = sand.u32 %s101, 1
        %s250 = smul.addr %s249, 8
        %s251 = scalar_lea.vmem [#allocation8], %s250
        // Predicated region
        $region41: #{tpu_custom_call.1} parent=31 // pred_check
          %p252 = pneg %p114
        $region42: #{tpu_custom_call.1} parent=31 // pred_check_branch
          %254 = sbr.rel (%p252) target = $region44
        $region43: #{tpu_custom_call.1} parent=31 // pred_region
          %255 = dma.done %s248, 128
        $region44: #{tpu_custom_call.1} parent=31 // pred_fallthru
          _
        %s256 = sand.u32 %s45, 1
        %s257 = scalar_lea.sflag [#allocation4], %s256
        %s258 = sand.u32 %s45, 1
        %s259 = smul.addr %s258, 8
        %s260 = scalar_lea.vmem [#allocation3], %s259
        %p261 = pneg %p58
        %p262 = pneg %p55
        %s263 = sand.u32 %s23, 1
        %s264 = scalar_lea.sflag [#allocation7], %s263
        %s265 = sand.u32 %s73, 1
        %s266 = smul.addr %s265, 2
        %s267 = scalar_lea.vmem [#allocation6], %s266
        %p268 = pneg %p86
        %p269 = pneg %p83
        %s270 = sand.u32 %s23, 1
        %s271 = scalar_lea.sflag [#allocation7], %s270
        %s272 = sand.u32 %s101, 1
        %s273 = smul.addr %s272, 8
        %s274 = scalar_lea.vmem [#allocation8], %s273
        %p275 = pneg %p114
        %p276 = pneg %p111
        %p277 = pneg %p140
        %p278 = pneg %p137
        %s279 = sand.u32 %s127, 1
        %s280 = scalar_lea.sflag [#allocation5], %s279
        %s281 = sand.u32 %s127, 1
        %s282 = smul.addr %s281, 8
        %s283 = scalar_lea.vmem [#allocation9], %s282
        %p284 = scmp.eq.s32.totalorder %s28, 0
        // Predicated region
        $region45: #{tpu_custom_call.1} parent=31 // pred_check
          %p285 = pneg %p284
        $region46: #{tpu_custom_call.1} parent=31 // pred_check_branch
          %287 = sbr.rel (%p285) target = $region48
        $region47: #{tpu_custom_call.1} parent=31 // pred_region
          %288 = vst [vmem:[#allocation2] sm:$0xff] 0.0
        $region48: #{tpu_custom_call.1} parent=31 // pred_fallthru
          _
        %v289 = vld [vmem:[%s233] sm:$0x3]
        %v290 = vld [vmem:[%s233 + $0x2] sm:$0x3]
        %v291 = vld [vmem:[%s233 + $0x4] sm:$0x3]
        %v292 = vld [vmem:[%s233 + $0x6] sm:$0x3]
        %v293 = vld [vmem:[%s242] sm:$0x3]
        %v294 = vld [vmem:[%s251] sm:$0x3]
        %v295 = vld [vmem:[%s251 + $0x2] sm:$0x3]
        %v296 = vld [vmem:[%s251 + $0x4] sm:$0x3]
        %v297 = vld [vmem:[%s251 + $0x6] sm:$0x3]
        %v298 = vsub.f32 %v289, %v293
        %v299 = vsub.f32 %v290, %v293
        %v300 = vsub.f32 %v291, %v293
        %v301 = vsub.f32 %v292, %v293
        %v302 = vmul.f32 %v294, %v298
        %v303 = vmul.f32 %v295, %v299
        %v304 = vmul.f32 %v296, %v300
        %v305 = vmul.f32 %v297, %v301
        %v306 = vmul.f32 %v302, %v298
        %v307 = vmul.f32 %v303, %v299
        %v308 = vmul.f32 %v304, %v300
        %v309 = vmul.f32 %v305, %v301
        %vm310 = vcmask 1041408
        %v311 = vsel %vm310, %v306, 0.0
        %v312 = vsel %vm310, %v307, 0.0
        %v313 = vadd.f32 %v311, %v312
        %v314 = vsel %vm310, %v308, 0.0
        %v315 = vadd.f32 %v313, %v314
        %v316 = vsel %vm310, %v309, 0.0
        %v317 = vadd.f32 %v315, %v316
        %v318 = vld [vmem:[#allocation2] sm:$0x3]
        %v319 = vadd.f32 %v318, %v317
        %320 = vst [vmem:[#allocation2] sm:$0x3] %v319
        // Predicated region
        $region49: #{tpu_custom_call.1} parent=31 // pred_check
          %p321 = pneg %p284
        $region50: #{tpu_custom_call.1} parent=31 // pred_check_branch
          %323 = sbr.rel (%p321) target = $region52
        $region51: #{tpu_custom_call.1} parent=31 // pred_region
          %v324 = vld [vmem:[#allocation2] sm:$0xff]
          %v325 = vadd.f32 %v324, 0.0
          %326 = vst [vmem:[%s283] sm:$0xff] %v325
        $region52: #{tpu_custom_call.1} parent=31 // pred_fallthru
          _
        %s327 = sand.u32 %s127, 1
        %s328 = scalar_lea.sflag [#allocation5], %s327
        %s329 = sand.u32 %s127, 1
        %s330 = smul.addr %s329, 8
        %s331 = scalar_lea.vmem [#allocation9], %s330
        // Predicated region
        $region53: #{tpu_custom_call.1} parent=31 // pred_check
          %p332 = pneg %p137
        $region54: #{tpu_custom_call.1} parent=31 // pred_check_branch
          %334 = sbr.rel (%p332) target = $region56
        $region55: #{tpu_custom_call.1} parent=31 // pred_region
          %s336 = ssub.s32 128, 128
          %337 = vsyncadd %s328, %s336
          %s338 = smul.addr %s27, 128
          %s339 = scalar_lea.hbm %s3, %s338
          %s341 = sshll.u32 %s331, 4
          %s342 = int_to_ptr.vmem [resolvable:$true] %s341
          %344 = dma.vmem_to_hbm [thread:$0]  %s342, 128, %s339, %s328
        $region56: #{tpu_custom_call.1} parent=31 // pred_fallthru
          _
      $region32: #{tpu_custom_call.1} parent=5 // pred_fallthru
        _
      %p345 = scmp.le.s32.totalorder 2, %s18
      // Predicated region
      $region57: #{tpu_custom_call.1} parent=5 // pred_check
        %p346 = pneg %p345
      $region58: #{tpu_custom_call.1} parent=5 // pred_check_branch
        %348 = sbr.rel (%p346) target = $region60
      $region59: #{tpu_custom_call.1} parent=5 // pred_region
        %s349 = ssub.s32 %s18, 2
        // Predicated region
        $region61: #{tpu_custom_call.1} parent=59 // pred_check
          %p350 = pneg %p143
        $region62: #{tpu_custom_call.1} parent=59 // pred_check_branch
          %352 = sbr.rel (%p350) target = $region64
        $region63: #{tpu_custom_call.1} parent=59 // pred_region
          %s353 = sand.u32 %s128, 1
          %s354 = scalar_lea.sflag [#allocation5], %s353
          %s355 = sand.u32 %s128, 1
          %s356 = smul.addr %s355, 8
          %s357 = scalar_lea.vmem [#allocation9], %s356
          %358 = dma.done %s354, 128
        $region64: #{tpu_custom_call.1} parent=59 // pred_fallthru
          _
      $region60: #{tpu_custom_call.1} parent=5 // pred_fallthru
        _
    $region6: #{tpu_custom_call.1} parent=1 // loop_footer
      %s22 = sadd.s32 1, %s18
    $region7: #{tpu_custom_call.1} parent=1 // loop_footer_branch
      %17 = sbr.rel target = $region3
    $region8: #{tpu_custom_call.1} parent=1 // loop_exit
      _
    %359 = vsyncpa [#allocation4], 1
    %s360 = scalar_lea.sflag [#allocation4], 1
    %361 = vsyncpa %s360, 1
    %362 = vsyncpa [#allocation7], 1
    %s363 = scalar_lea.sflag [#allocation7], 1
    %364 = vsyncpa %s363, 1
    %365 = vsyncpa [#allocation5], 1
    %s366 = scalar_lea.sflag [#allocation5], 1
    %367 = vsyncpa %s366, 1

</llo_original>
